<compile_context>
chip_gen: v7x
topology: tpu7x:2x2x1
jax: 0.10.0
libtpu: 0.0.40
codegen_flags: <defaults>
</compile_context>

<pallas_src>
import functools

import jax
import jax.numpy as jnp
from jax.experimental import pallas as pl
from jax.experimental.pallas import tpu as pltpu


def _round_up(x, m):
    return ((x + m - 1) // m) * m


def _largest_divisor_tile(total, cap, quantum):
    """Largest multiple of `quantum` that is <= cap and divides `total`."""
    if total <= cap:
        return total
    best = quantum
    t = quantum
    while t <= cap:
        if total % t == 0:
            best = t
        t += quantum
    return best


def fc_relu_kernel(x_ref, w_ref, b_ref, o_ref, acc_ref):
    """One (tm, tn) output tile; K is the innermost ("arbitrary") grid axis."""
    k = pl.program_id(2)

    # Dense layer on the MXU (bf16 operands), accumulate in f32.
    prod = jnp.dot(x_ref[...], w_ref[...], preferred_element_type=jnp.float32)

    @pl.when(k == 0)
    def _():
        acc_ref[...] = prod          # first K step: overwrite, no zero-fill+add

    @pl.when(k > 0)
    def _():
        acc_ref[...] += prod

    @pl.when(k == pl.num_programs(2) - 1)
    def _():
        # Epilogue: bias broadcast over batch rows, ReLU on the VPU.
        h = acc_ref[...] + b_ref[...].astype(jnp.float32)
        o_ref[...] = jnp.maximum(h, 0.0).astype(o_ref.dtype)
        # TODO(synk): dropout (p>0) and BatchNorm1d branches of FCLayer are
        # disabled by default (dropout=0.0, b_norm=False) and not implemented.


def prepare_fc_params(weight, bias, compute_dtype=jnp.bfloat16):
    """One-time (init-time) prep: transpose + lane-pad + downcast the weight.

    weight: (out_size, in_size)  -- torch.nn.Linear layout.
    bias:   (out_size,) or (1, out_size).
    Returns (weight_t_padded [Kp, Np] compute_dtype, bias_padded [1, Np] f32).
    Doing this once keeps every forward call a single-pass W stream.
    """
    out_size, in_size = weight.shape
    Kp = _round_up(in_size, 128)
    Np = _round_up(out_size, 128)
    w_t = jnp.asarray(weight).T.astype(compute_dtype)              # (K, N)
    w_p = jnp.zeros((Kp, Np), compute_dtype).at[:in_size, :out_size].set(w_t)
    b = jnp.asarray(bias).reshape(1, -1).astype(jnp.float32)
    b_p = jnp.zeros((1, Np), jnp.float32).at[:, :out_size].set(b)
    return w_p, b_p


@functools.partial(
    jax.jit, static_argnames=("out_size", "tm", "tn", "tk", "compute_dtype"))
def fc_layer(x, w_p, b_p, *, out_size, tm=None, tn=None, tk=None,
             compute_dtype=jnp.bfloat16):
    """relu(x @ W + b) with pre-padded params from prepare_fc_params.

    x:   (B, in_size)              any float dtype (streamed as compute_dtype)
    w_p: (Kp, Np) compute_dtype    Kp, Np multiples of 128
    b_p: (1, Np)  float32
    """
    B, K = x.shape
    Kp, Np = w_p.shape
    out_dtype = x.dtype

    # ---- Tile selection ----------------------------------------------------
    # M: single i-block for inference-sized batches so W is streamed exactly
    #    once; otherwise 256-row tiles (padded rows are zeros -> free).
    Mp = _round_up(B, 8)
    if tm is None:
        tm = Mp if Mp <= 512 else 256
    Mp = _round_up(Mp, tm)
    # N / K: largest 128-multiple tile that divides the (pre-)padded extent,
    # capped at 256 / 1024.  Keeps the double-buffered footprint a few MiB
    # (safe on v7x's 32 MiB scoped VMEM) while amortizing per-step overhead
    # and filling the 256-wide MXU on v6e/v7x.
    if tn is None:
        tn = _largest_divisor_tile(Np, 256, 128)
    if tk is None:
        tk = _largest_divisor_tile(Kp, 1024, 128)
    # v7x megacore: ensure a "parallel" axis has >=2 blocks when possible.
    if Mp // tm == 1 and Np // tn == 1 and Np >= 256:
        tn = 128

    # ---- Per-call input prep (static checks; no-ops when already aligned) --
    if x.dtype != compute_dtype:
        x = x.astype(compute_dtype)
    if (B, K) != (Mp, Kp):
        x = jnp.zeros((Mp, Kp), compute_dtype).at[:B, :K].set(x)

    grid = (Mp // tm, Np // tn, Kp // tk)

    cost = pl.CostEstimate(
        flops=2 * Mp * Np * Kp,
        transcendentals=0,
        bytes_accessed=(Mp * Kp * x.dtype.itemsize
                        + (Mp // tm) * Kp * Np * w_p.dtype.itemsize
                        + Np * 4
                        + Mp * Np * jnp.dtype(out_dtype).itemsize),
    )

    out_p = pl.pallas_call(
        fc_relu_kernel,
        out_shape=jax.ShapeDtypeStruct((Mp, Np), out_dtype),
        grid_spec=pltpu.PrefetchScalarGridSpec(
            num_scalar_prefetch=0,
            grid=grid,
            in_specs=[
                pl.BlockSpec((tm, tk), lambda i, j, k: (i, k)),
                # If a trace shows an exposed W DMA gap, sweep
                # pipeline_mode=pl.Buffered(3) on this spec.
                pl.BlockSpec((tk, tn), lambda i, j, k: (k, j)),
                pl.BlockSpec((1, tn), lambda i, j, k: (0, j)),
            ],
            out_specs=pl.BlockSpec((tm, tn), lambda i, j, k: (i, j)),
            scratch_shapes=[pltpu.VMEM((tm, tn), jnp.float32)],
        ),
        compiler_params=pltpu.CompilerParams(
            dimension_semantics=("parallel", "parallel", "arbitrary"),
        ),
        cost_estimate=cost,
    )(x, w_p, b_p)

    # Strip padding only when there is any (avoids an extra HBM copy).
    if (Mp, Np) != (B, out_size):
        out_p = out_p[:B, :out_size]
    return out_p


if __name__ == "__main__":
    # Module config: FCLayer(in_size=32, out_size=64, activation='ReLU',
    #                        dropout=0.0, b_norm=False, bias=True)
    batch, in_size, out_size = 8, 32, 64

    key = jax.random.PRNGKey(0)
    kx, kw, kb = jax.random.split(key, 3)

    # Deterministic init matching torch.nn.Linear default:
    # U(-sqrt(k), sqrt(k)) with k = 1/in_size, for both weight and bias.
    bound = 1.0 / (in_size ** 0.5)
    weight = jax.random.uniform(kw, (out_size, in_size), jnp.float32, -bound, bound)
    bias = jax.random.uniform(kb, (1, out_size), jnp.float32, -bound, bound)
    x = jax.random.normal(kx, (batch, in_size), jnp.float32)

    # Init-time prep (transpose + pad + bf16) -- NOT on the per-call path.
    w_p, b_p = prepare_fc_params(weight, bias)

    # dropout=0.0 and b_norm=False by default -> no dropout / batchnorm.
    out = fc_layer(x, w_p, b_p, out_size=out_size)
    out = jax.block_until_ready(out)

    # Reference: same bf16-rounded operands, f32 accumulate (matches MXU path).
    x_bf = x.astype(jnp.bfloat16).astype(jnp.float32)
    w_bf = weight.T.astype(jnp.bfloat16).astype(jnp.float32)
    ref = jnp.maximum(x_bf @ w_bf + bias, 0.0)

    assert out.shape == (batch, out_size)
    assert out.dtype == x.dtype
    assert jnp.allclose(out, ref, atol=1e-3, rtol=1e-3), \
        float(jnp.max(jnp.abs(out - ref)))

    print("KERNEL_OK")
</pallas_src>

<mosaic_0001>
module attributes {stable_mosaic.version = 11 : i64} {
  func.func @fc_relu_kernel(%arg0: i32, %arg1: i32, %arg2: i32, %arg3: memref<8x128xbf16, #tpu.memory_space<vmem>>, %arg4: memref<128x128xbf16, #tpu.memory_space<vmem>>, %arg5: memref<1x128xf32, #tpu.memory_space<vmem>>, %arg6: memref<8x128xf32, #tpu.memory_space<vmem>>, %arg7: memref<8x128xf32, #tpu.memory_space<vmem>>) attributes {dimension_semantics = [#tpu.dimension_semantics<parallel>, #tpu.dimension_semantics<parallel>, #tpu.dimension_semantics<arbitrary>], iteration_bounds = array<i64: 1, 1, 1>, scalar_prefetch = 0 : i64, scratch_operands = 1 : i64, tpu.core_type = #tpu.core_type<tc>, window_params = [{transform_indices = @transform_0, window_bounds = array<i64: 8, 128>}, {transform_indices = @transform_1, window_bounds = array<i64: 128, 128>}, {transform_indices = @transform_2, window_bounds = array<i64: 1, 128>}, {transform_indices = @transform_3, window_bounds = array<i64: 8, 128>}]} {
    %c0 = arith.constant 0 : index
    %c0_0 = arith.constant 0 : index
    %0 = vector.load %arg3[%c0, %c0_0] : memref<8x128xbf16, #tpu.memory_space<vmem>>, vector<8x128xbf16>
    %c0_1 = arith.constant 0 : index
    %c0_2 = arith.constant 0 : index
    %1 = vector.load %arg4[%c0_1, %c0_2] : memref<128x128xbf16, #tpu.memory_space<vmem>>, vector<128x128xbf16>
    %cst = arith.constant dense<0.000000e+00> : vector<8x128xf32>
    %2 = tpu.matmul %0, %1, %cst {dimension_numbers = #tpu.dot_dimension_numbers<[1], [0], [0], [1], [0, 0, 1, 1], [], []>} : vector<8x128xbf16>, vector<128x128xbf16>, vector<8x128xf32> -> vector<8x128xf32>
    %c0_i32 = arith.constant 0 : i32
    %3 = arith.cmpi eq, %arg2, %c0_i32 : i32
    %4 = arith.extui %3 : i1 to i32
    %c0_i32_3 = arith.constant 0 : i32
    %5 = arith.cmpi ne, %4, %c0_i32_3 : i32
    scf.if %5 {
      %c0_8 = arith.constant 0 : index
      %c0_9 = arith.constant 0 : index
      %12 = vector.load %arg7[%c0_8, %c0_9] : memref<8x128xf32, #tpu.memory_space<vmem>>, vector<8x128xf32>
      tpu.vector_store %arg7[%c0_8, %c0_9], %2 {strides = array<i32>} : memref<8x128xf32, #tpu.memory_space<vmem>>, vector<8x128xf32>,
    } else {
    }
    %c0_i32_4 = arith.constant 0 : i32
    %6 = arith.cmpi sgt, %arg2, %c0_i32_4 : i32
    %7 = arith.extui %6 : i1 to i32
    %c0_i32_5 = arith.constant 0 : i32
    %8 = arith.cmpi ne, %7, %c0_i32_5 : i32
    scf.if %8 {
      %c0_8 = arith.constant 0 : index
      %c0_9 = arith.constant 0 : index
      %12 = vector.load %arg7[%c0_8, %c0_9] : memref<8x128xf32, #tpu.memory_space<vmem>>, vector<8x128xf32>
      %13 = arith.addf %12, %2 : vector<8x128xf32>
      %c0_10 = arith.constant 0 : index
      %c0_11 = arith.constant 0 : index
      %14 = vector.load %arg7[%c0_10, %c0_11] : memref<8x128xf32, #tpu.memory_space<vmem>>, vector<8x128xf32>
      tpu.vector_store %arg7[%c0_10, %c0_11], %13 {strides = array<i32>} : memref<8x128xf32, #tpu.memory_space<vmem>>, vector<8x128xf32>,
    } else {
    }
    %c0_i32_6 = arith.constant 0 : i32
    %9 = arith.cmpi eq, %arg2, %c0_i32_6 : i32
    %10 = arith.extui %9 : i1 to i32
    %c0_i32_7 = arith.constant 0 : i32
    %11 = arith.cmpi ne, %10, %c0_i32_7 : i32
    scf.if %11 {
      %c0_8 = arith.constant 0 : index
      %c0_9 = arith.constant 0 : index
      %12 = vector.load %arg7[%c0_8, %c0_9] : memref<8x128xf32, #tpu.memory_space<vmem>>, vector<8x128xf32>
      %c0_10 = arith.constant 0 : index
      %c0_11 = arith.constant 0 : index
      %13 = vector.load %arg5[%c0_10, %c0_11] : memref<1x128xf32, #tpu.memory_space<vmem>>, vector<1x128xf32>
      %14 = vector.broadcast %13 : vector<1x128xf32> to vector<8x128xf32>
      %15 = arith.addf %12, %14 : vector<8x128xf32>
      %cst_12 = arith.constant 0.000000e+00 : f32
      %16 = vector.broadcast %cst_12 : f32 to vector<8x128xf32>
      %17 = arith.maximumf %15, %16 : vector<8x128xf32>
      %c0_13 = arith.constant 0 : index
      %c0_14 = arith.constant 0 : index
      %18 = vector.load %arg6[%c0_13, %c0_14] : memref<8x128xf32, #tpu.memory_space<vmem>>, vector<8x128xf32>
      tpu.vector_store %arg6[%c0_13, %c0_14], %17 {strides = array<i32>} : memref<8x128xf32, #tpu.memory_space<vmem>>, vector<8x128xf32>,
    } else {
    }
    return
  }
  func.func @transform_0(%arg0: i32, %arg1: i32, %arg2: i32) -> (i32, i32) {
    %c0_i32 = arith.constant 0 : i32
    return %arg0, %arg2 : i32, i32
  }
  func.func @transform_1(%arg0: i32, %arg1: i32, %arg2: i32) -> (i32, i32) {
    %c0_i32 = arith.constant 0 : i32
    return %arg2, %arg1 : i32, i32
  }
  func.func @transform_2(%arg0: i32, %arg1: i32, %arg2: i32) -> (i32, i32) {
    %c0_i32 = arith.constant 0 : i32
    %c0_i32_0 = arith.constant 0 : i32
    return %c0_i32, %arg1 : i32, i32
  }
  func.func @transform_3(%arg0: i32, %arg1: i32, %arg2: i32) -> (i32, i32) {
    %c0_i32 = arith.constant 0 : i32
    return %arg0, %arg1 : i32, i32
  }
}

</mosaic_0001>

<llo_original>
// kernel: fc_layer.1
$region0: #{fc_layer.1}
  #allocation0 [shape = 'u32[]', space=smem, size = 0x4, offset = 0x4, fixed_abs, tag = 'smem constant byte address 0x4 - core index']
  #allocation1 [shape = 'u32[144,128]{1,0:T(1,128)}', space=vmem, size = 0x12000, scoped, tag = 'internal scratch']
  #allocation2 [shape = 'f32[8,128]{1,0:T(8,128)}', space=vmem, size = 0x1000, scoped, tag = 'scratch operand']
  %s0 = inlined_call_operand.vmem [shape: bf16[8,128], index: 0, kind: input, shape index: {}]
  %s1 = inlined_call_operand.hbm [shape: bf16[128,128], index: 1, kind: input, shape index: {}]
  %s2 = inlined_call_operand.vmem [shape: f32[1,128], index: 2, kind: input, shape index: {}]
  %s3 = inlined_call_operand.hbm [shape: f32[8,128], index: 3, kind: output, shape index: {}]
  %s4 = sld [smem:[#allocation0]]
  $region38: #{fc_layer.1} parent=0
    _
  %s6 = ssub.s32 1, %s4
  %s7 = scalar_select 0, %s6, %s4
  $region1: #{fc_layer.1} parent=0
    #allocation3 [shape = 'u8[32768]{0}', space=vmem, size = 0x8000, scoped, tag = 'input window, operand 1, single buffered']
    #allocation4 [shape = 's32[1]{0}', space=sflag, size = 0x4, scoped, tag = 'scoped memory for fc_layer.1']
    #allocation5 [shape = 's32[1]{0}', space=sflag, size = 0x4, scoped, tag = 'scoped memory for fc_layer.1']
    #allocation6 [shape = 'u8[4096]{0}', space=vmem, size = 0x1000, scoped, tag = 'output window, operand 0, single buffered']
    %8 = vsyncpa [#allocation4], 0
    %9 = vsyncpa [#allocation5], 0
    // Predicated region
    $region2: #{fc_layer.1} parent=1 // pred_check
      _
    $region3: #{fc_layer.1} parent=1 // pred_check_branch
      %11 = sbr.rel (0) target = $region5
    $region4: #{fc_layer.1} parent=1 // pred_region
      _
    $region5: #{fc_layer.1} parent=1 // pred_fallthru
      _
    // Predicated region
    $region6: #{fc_layer.1} parent=1 // pred_check
      _
    $region7: #{fc_layer.1} parent=1 // pred_check_branch
      %13 = sbr.rel (0) target = $region9
    $region8: #{fc_layer.1} parent=1 // pred_region
      %s15 = ssub.s32 1024, 1024
      %16 = vsyncadd [#allocation4], %s15
      %s17 = sshll.u32 [#allocation3], 4
      %s18 = int_to_ptr.vmem [resolvable:$true] %s17
      %23 = dma.hbm_to_vmem [thread:$0]  %s1, 1024, %s18, [#allocation4], 64, 64, 4
    $region9: #{fc_layer.1} parent=1 // pred_fallthru
      _
    // Predicated region
    $region10: #{fc_layer.1} parent=1 // pred_check
      _
    $region11: #{fc_layer.1} parent=1 // pred_check_branch
      %25 = sbr.rel (0) target = $region13
    $region12: #{fc_layer.1} parent=1 // pred_region
      _
    $region13: #{fc_layer.1} parent=1 // pred_fallthru
      _
    // Predicated region
    $region14: #{fc_layer.1} parent=1 // pred_check
      _
    $region15: #{fc_layer.1} parent=1 // pred_check_branch
      %27 = sbr.rel (0) target = $region17
    $region16: #{fc_layer.1} parent=1 // pred_region
      %28 = dma.done [#allocation4], 1024
    $region17: #{fc_layer.1} parent=1 // pred_fallthru
      _
    %v30 = vld [vmem:[%s0] sm:$0xf]
    %v31 = vld [vmem:[#allocation3] sm:$0xf]
    %v32 = vld [vmem:[#allocation3 + $0x4] sm:$0xf]
    %v33 = vld [vmem:[#allocation3 + $0x8] sm:$0xf]
    %v34 = vld [vmem:[#allocation3 + $0xc] sm:$0xf]
    %v35 = vld [vmem:[#allocation3 + $0x10] sm:$0xf]
    %v36 = vld [vmem:[#allocation3 + $0x14] sm:$0xf]
    %v37 = vld [vmem:[#allocation3 + $0x18] sm:$0xf]
    %v38 = vld [vmem:[#allocation3 + $0x1c] sm:$0xf]
    %v39 = vld [vmem:[#allocation3 + $0x20] sm:$0xf]
    %v40 = vld [vmem:[#allocation3 + $0x24] sm:$0xf]
    %v41 = vld [vmem:[#allocation3 + $0x28] sm:$0xf]
    %v42 = vld [vmem:[#allocation3 + $0x2c] sm:$0xf]
    %v43 = vld [vmem:[#allocation3 + $0x30] sm:$0xf]
    %v44 = vld [vmem:[#allocation3 + $0x34] sm:$0xf]
    %v45 = vld [vmem:[#allocation3 + $0x38] sm:$0xf]
    %v46 = vld [vmem:[#allocation3 + $0x3c] sm:$0xf]
    %v63 = vunpack.c.l.b16 %v31
    %v64 = vunpack.c.l.b16 %v32
    %v65 = vunpack.c.l.b16 %v33
    %v66 = vunpack.c.l.b16 %v34
    %v67 = vunpack.c.l.b16 %v35
    %v68 = vunpack.c.l.b16 %v36
    %v69 = vunpack.c.l.b16 %v37
    %v70 = vunpack.c.l.b16 %v38
    %v71 = vunpack.c.l.b16 %v39
    %v72 = vunpack.c.l.b16 %v40
    %v73 = vunpack.c.l.b16 %v41
    %v74 = vunpack.c.l.b16 %v42
    %v75 = vunpack.c.l.b16 %v43
    %v76 = vunpack.c.l.b16 %v44
    %v77 = vunpack.c.l.b16 %v45
    %v78 = vunpack.c.l.b16 %v46
    %v79 = vpack.c.b16 %v64, %v63
    %v80 = vpack.c.b16 %v66, %v65
    %v81 = vpack.c.b16 %v68, %v67
    %v82 = vpack.c.b16 %v70, %v69
    %v83 = vpack.c.b16 %v72, %v71
    %v84 = vpack.c.b16 %v74, %v73
    %v85 = vpack.c.b16 %v76, %v75
    %v86 = vpack.c.b16 %v78, %v77
    %95 = vmatprep.subr.bf16.mxu0 0
    %96 = vmatpush1.bf16.msra.mxu0 %v79
    %97 = vmatprep.subr.bf16.mxu0 0
    %98 = vmatpush1.bf16.msra.mxu0 %v80
    %99 = vmatprep.subr.bf16.mxu0 0
    %100 = vmatpush1.bf16.msra.mxu0 %v81
    %101 = vmatprep.subr.bf16.mxu0 0
    %102 = vmatpush1.bf16.msra.mxu0 %v82
    %103 = vmatprep.subr.bf16.mxu0 0
    %104 = vmatpush1.bf16.msra.mxu0 %v83
    %105 = vmatprep.subr.bf16.mxu0 0
    %106 = vmatpush1.bf16.msra.mxu0 %v84
    %107 = vmatprep.subr.bf16.mxu0 0
    %108 = vmatpush1.bf16.msra.mxu0 %v85
    %109 = vmatprep.subr.bf16.mxu0 0
    %110 = vmatpush1.bf16.msra.mxu0 %v86
    %111 = vmatprep.subr.bf16.mxu0 0
    %112 = vmatpush1.bf16.msra.mxu0 0
    %113 = vmatprep.subr.bf16.mxu0 0
    %114 = vmatpush1.bf16.msra.mxu0 0
    %115 = vmatprep.subr.bf16.mxu0 0
    %116 = vmatpush1.bf16.msra.mxu0 0
    %117 = vmatprep.subr.bf16.mxu0 0
    %118 = vmatpush1.bf16.msra.mxu0 0
    %119 = vmatprep.subr.bf16.mxu0 0
    %120 = vmatpush1.bf16.msra.mxu0 0
    %121 = vmatprep.subr.bf16.mxu0 0
    %122 = vmatpush1.bf16.msra.mxu0 0
    %123 = vmatprep.subr.bf16.mxu0 0
    %124 = vmatpush1.bf16.msra.mxu0 0
    %125 = vmatprep.subr.bf16.mxu0 0
    %126 = vmatpush1.bf16.msra.mxu0 0
    %127 = vmatprep.mubr.bf16.mxu0 0
    %128 = vmatmul.mubr.bf16.gmra.mrb[0].mxu0 %v30
    %v129 = vpop.f32.mrb[0].mxu0
    %v130 = vadd.f32 0.0, %v129
    %v131 = vpop.f32.mrb[0].mxu0
    %v132 = vpop.f32.mrb[0].mxu0
    %v133 = vpop.f32.mrb[0].mxu0
    %134 = vdwg.mxu0
    %p135 = scmp.eq.s32.totalorder 0, 0
    // Predicated region
    $region18: #{fc_layer.1} parent=1 // pred_check
      %p136 = pneg %p135
    $region19: #{fc_layer.1} parent=1 // pred_check_branch
      %138 = sbr.rel (%p136) target = $region21
    $region20: #{fc_layer.1} parent=1 // pred_region
      %139 = vst [vmem:[#allocation2] sm:$0xff] %v130
    $region21: #{fc_layer.1} parent=1 // pred_fallthru
      _
    %p140 = scmp.gt.s32.totalorder 0, 0
    // Predicated region
    $region22: #{fc_layer.1} parent=1 // pred_check
      %p141 = pneg %p140
    $region23: #{fc_layer.1} parent=1 // pred_check_branch
      %143 = sbr.rel (%p141) target = $region25
    $region24: #{fc_layer.1} parent=1 // pred_region
      %v144 = vld [vmem:[#allocation2] sm:$0xff]
      %v145 = vadd.f32 %v144, %v130
      %146 = vst [vmem:[#allocation2] sm:$0xff] %v145
    $region25: #{fc_layer.1} parent=1 // pred_fallthru
      _
    // Predicated region
    $region26: #{fc_layer.1} parent=1 // pred_check
      %p147 = pneg %p135
    $region27: #{fc_layer.1} parent=1 // pred_check_branch
      %149 = sbr.rel (%p147) target = $region29
    $region28: #{fc_layer.1} parent=1 // pred_region
      %v150 = vld [vmem:[#allocation2] sm:$0xff]
      %v151 = vld [vmem:[%s2] sm:$0x1]
      %v153 = vlaneseq
      %v154 = vshrl.u32 %v153, 7
      %v155 = vsub.s32 0, %v154
      %v156 = vrot.slane %v151, %v155
      %v158 = vadd.f32 %v150, %v156
      %v159 = vmax.f32 %v158, 0.0
      %160 = vst [vmem:[#allocation6] sm:$0xff] %v159
    $region29: #{fc_layer.1} parent=1 // pred_fallthru
      _
    // Predicated region
    $region30: #{fc_layer.1} parent=1 // pred_check
      _
    $region31: #{fc_layer.1} parent=1 // pred_check_branch
      %162 = sbr.rel (0) target = $region33
    $region32: #{fc_layer.1} parent=1 // pred_region
      %s164 = ssub.s32 128, 128
      %165 = vsyncadd [#allocation5], %s164
      %s167 = sshll.u32 [#allocation6], 4
      %s168 = int_to_ptr.vmem [resolvable:$true] %s167
      %170 = dma.vmem_to_hbm [thread:$0]  %s168, 128, %s3, [#allocation5]
    $region33: #{fc_layer.1} parent=1 // pred_fallthru
      _
    // Predicated region
    $region34: #{fc_layer.1} parent=1 // pred_check
      _
    $region35: #{fc_layer.1} parent=1 // pred_check_branch
      %172 = sbr.rel (0) target = $region37
    $region36: #{fc_layer.1} parent=1 // pred_region
      %173 = dma.done [#allocation5], 128
    $region37: #{fc_layer.1} parent=1 // pred_fallthru
      _
    %174 = vsyncpa [#allocation4], 1
    %175 = vsyncpa [#allocation5], 1

</llo_original>
